<compile_context>
chip_gen: v7x
topology: tpu7x:2x2x1
jax: 0.10.0
libtpu: 0.0.40
codegen_flags: <defaults>
</compile_context>

<pallas_src>
import functools

import jax
import jax.numpy as jnp
from jax import lax
from jax.experimental import pallas as pl
from jax.experimental.pallas import tpu as pltpu

BN_EPS = 1e-5


def _round_up(a, b):
    return (a + b - 1) // b * b


def _physical_vmem_bytes():
    try:
        info = pltpu.get_tpu_info()
        v = int(getattr(info, "vmem_capacity_bytes", 0) or 0)
        if v > 0:
            return v
    except Exception:
        pass
    return 64 << 20                       # conservative default: v7x per-TC VMEM


def _choose_tiling(N, C, HW, itemsize, target_step_bytes):
    """Byte-budget-driven tiling: (hw_tile, acc_w, num_hw, nb, splits, nh_per_split, depth)."""
    budget = min(int(_physical_vmem_bytes() * 0.6), 96 << 20)
    depth = 3                                             # requested input buffers

    if HW < 128:
        hw_tile = HW                                      # full-extent lane dim is legal
    else:
        by_target = max(128, (target_step_bytes // max(1, C * itemsize)) // 128 * 128)
        by_vmem = max(128, ((budget - (4 << 20)) // max(1, depth * C * itemsize)) // 128 * 128)
        hw_tile = min(_round_up(HW, 128), by_target, by_vmem, 128 * 512)

    num_hw = -(-HW // hw_tile)

    # Accumulator / sub-chunk width (lane aligned, <= 512).
    if hw_tile % 512 == 0:
        acc_w = 512
    elif hw_tile % 256 == 0:
        acc_w = 256
    elif hw_tile % 128 == 0:
        acc_w = 128
    else:
        acc_w = hw_tile                                   # HW < 128 case

    # Small-sample case: block several batch samples per pipeline step so each
    # DMA moves a useful number of bytes (per-step overhead ~0.35 us).
    nb = 1
    if num_hw == 1 and N > 1:
        per_sample = C * hw_tile * itemsize
        if per_sample < (1 << 20):
            nb = int(min(N, max(1, target_step_bytes // per_sample)))
            nb_cap = int(max(1, (budget - (4 << 20)) //
                             max(1, depth * per_sample + C * acc_w * 4)))
            nb = max(1, min(nb, nb_cap))

    # 2-way spatial split so both v7x TensorCores stream HBM when N == 1.
    # Harmless on 1-TC chips (same total steps + a tiny partial combine).
    splits = 2 if (N == 1 and num_hw >= 2 and num_hw % 2 == 0) else 1
    # TODO(synk): odd num_hw with N == 1 is left unsplit (one v7x core idle).
    nh_per_split = num_hw // splits
    return hw_tile, acc_w, num_hw, nb, splits, nh_per_split, depth


def _tile_partial(x_ref, col0, *, acc_w, n_sub, hw, apply_mask):
    """Sum of the n_sub lane-aligned (nb, C, acc_w) sub-chunks of the current
    input tile, combined in registers so the accumulator sees one RMW/step."""
    total = None
    for k in range(n_sub):
        c = x_ref[:, :, k * acc_w:(k + 1) * acc_w].astype(jnp.float32)
        if apply_mask:
            lane = lax.broadcasted_iota(jnp.int32, c.shape, c.ndim - 1)
            c = jnp.where(lane + (col0 + k * acc_w) < hw, c, 0.0)
        total = c if total is None else total + c
    return total


def _pooled_sum_kernel(x_ref, out_ref, acc_ref, *, hw, hw_tile, acc_w,
                       nh_per_split, needs_mask, single_step):
    # x_ref: (nb, C, hw_tile)   out_ref: (nb, C, 1)   acc_ref: f32 scratch
    s = pl.program_id(1)                       # spatial split (v7x 2-TC axis)
    h = pl.program_id(2)                       # spatial tile within the split
    col0 = (s * nh_per_split + h) * hw_tile    # first HW column of this tile
    n_sub = hw_tile // acc_w
    part = functools.partial(_tile_partial, x_ref, col0,
                             acc_w=acc_w, n_sub=n_sub, hw=hw)

    if single_step:
        # Exactly one spatial tile per output block: reduce it straight to the
        # pooled sum — no accumulator scratch traffic at all.
        p = part(apply_mask=needs_mask)
        out_ref[...] = jnp.sum(p, axis=-1, keepdims=True).astype(out_ref.dtype)
        return

    @pl.when(h == 0)
    def _init():
        acc_ref[...] = jnp.zeros_like(acc_ref)

    if needs_mask:
        ragged = col0 + hw_tile > hw

        @pl.when(jnp.logical_not(ragged))
        def _full():
            acc_ref[...] += part(apply_mask=False)

        @pl.when(ragged)
        def _edge():
            acc_ref[...] += part(apply_mask=True)
    else:
        acc_ref[...] += part(apply_mask=False)

    @pl.when(h == pl.num_programs(2) - 1)
    def _finalize():
        out_ref[...] = jnp.sum(acc_ref[...], axis=-1,
                               keepdims=True).astype(out_ref.dtype)


def _pooled_sums(x_flat, *, hw_tile, acc_w, nb, splits, nh_per_split,
                 needs_mask, single_step, depth):
    """Per-sample (optionally per-split) spatial sums: (N, splits, C, 1) f32."""
    N, C, HW = x_flat.shape
    itemsize = x_flat.dtype.itemsize
    n_blocks = -(-N // nb)
    grid = (n_blocks, splits, nh_per_split)

    kernel = functools.partial(
        _pooled_sum_kernel, hw=HW, hw_tile=hw_tile, acc_w=acc_w,
        nh_per_split=nh_per_split, needs_mask=needs_mask,
        single_step=single_step)

    x_block_bytes = nb * C * hw_tile * itemsize
    acc_bytes = (8 * 128 * 4) if single_step else nb * C * acc_w * 4
    inter_bytes = nb * C * acc_w * 4               # in-flight f32 partial tile
    ws = depth * x_block_bytes + acc_bytes + inter_bytes + 2 * nb * C * 4
    vmem_limit = int(max(16 << 20, ws + (4 << 20)))

    x_idx = lambda b, s, h: (b, 0, s * nh_per_split + h)
    out_idx = lambda b, s, h: (b, s, 0, 0)

    def build(use_buffered):
        if use_buffered:
            x_spec = pl.BlockSpec((nb, C, hw_tile), x_idx,
                                  pipeline_mode=pl.Buffered(depth))
        else:
            x_spec = pl.BlockSpec((nb, C, hw_tile), x_idx)
        return pl.pallas_call(
            kernel,
            out_shape=jax.ShapeDtypeStruct((N, splits, C, 1), jnp.float32),
            grid_spec=pltpu.PrefetchScalarGridSpec(
                num_scalar_prefetch=0,
                grid=grid,
                in_specs=[x_spec],
                out_specs=pl.BlockSpec((nb, None, C, 1), out_idx),
                scratch_shapes=[pltpu.VMEM(
                    (8, 128) if single_step else (nb, C, acc_w), jnp.float32)],
            ),
            compiler_params=pltpu.CompilerParams(
                dimension_semantics=("parallel", "parallel", "arbitrary"),
                vmem_limit_bytes=vmem_limit,
            ),
            cost_estimate=pl.CostEstimate(
                flops=int(N * C * HW),
                transcendentals=0,
                bytes_accessed=int(N * C * HW * itemsize + N * splits * C * 4),
            ),
        )

    if nh_per_split * splits * n_blocks > 2:
        try:
            return jax.block_until_ready(build(True)(x_flat))
        except Exception:
            # pipeline_mode / Buffered not supported in this build: fall back
            # to the default double-buffered pipeline.
            pass
    return build(False)(x_flat)


def channel_attention_forward(x, params, *, target_step_bytes=4 << 20):
    """x: (N, C_in, H, W) NCHW.  Returns (N, C_in, 1, 1) attention logits."""
    N, C, H, W = x.shape
    HW = H * W
    x_flat = x.reshape(N, C, HW)

    (hw_tile, acc_w, num_hw, nb, splits,
     nh_per_split, depth) = _choose_tiling(N, C, HW, x.dtype.itemsize,
                                           target_step_bytes)
    needs_mask = num_hw * hw_tile != HW
    single_step = nh_per_split == 1

    pooled = _pooled_sums(
        x_flat, hw_tile=hw_tile, acc_w=acc_w, nb=nb, splits=splits,
        nh_per_split=nh_per_split, needs_mask=needs_mask,
        single_step=single_step, depth=depth)            # (N, splits, C, 1) f32
    pooled_sum = pooled.sum(axis=1)[..., 0]              # (N, C) f32

    # Eval-mode BN and the 1/HW mean are folded into conv1; the two 1x1 convs
    # run as a well-shaped batched matmul pair in XLA (FLOPs are negligible).
    scale = params["gamma"] * lax.rsqrt(params["var"] + BN_EPS)         # (C_out,)
    w1_eff = (params["w1"] * scale[:, None] / HW).astype(jnp.float32)   # (C_out, C_in)
    b1_eff = ((params["b1"] - params["mean"]) * scale
              + params["beta"]).astype(jnp.float32)                     # (C_out,)
    h = jnp.maximum(pooled_sum @ w1_eff.T + b1_eff, 0.0)                # (N, C_out)
    o = h @ params["w2"].astype(jnp.float32).T + params["b2"].astype(jnp.float32)
    # NOTE: logits are cast back to x.dtype (bf16 inputs -> bf16 logits).
    return o.reshape(N, C, 1, 1).astype(x.dtype)


def make_params(key, in_channels, out_channels):
    """Deterministic synthetic parameters matching the module's shapes."""
    k1, k2, k3, k4, k5, k6 = jax.random.split(key, 6)
    return {
        # Conv2d(in, out, 1): weight (C_out, C_in, 1, 1) -> (C_out, C_in)
        "w1": jax.random.normal(k1, (out_channels, in_channels), jnp.float32) * 0.1,
        "b1": jax.random.normal(k2, (out_channels,), jnp.float32) * 0.1,
        # BatchNorm2d(out) running stats / affine params (eval mode)
        "gamma": jnp.full((out_channels,), 1.1, jnp.float32),
        "beta": jnp.full((out_channels,), 0.05, jnp.float32),
        "mean": jax.random.normal(k3, (out_channels,), jnp.float32) * 0.01,
        "var": jnp.abs(jax.random.normal(k4, (out_channels,), jnp.float32)) * 0.1 + 1.0,
        # Conv2d(out, in, 1): weight (C_in, C_out, 1, 1) -> (C_in, C_out)
        "w2": jax.random.normal(k5, (in_channels, out_channels), jnp.float32) * 0.1,
        "b2": jax.random.normal(k6, (in_channels,), jnp.float32) * 0.1,
    }


def reference_forward(x, p):
    """Pure-JAX reference mirroring the PyTorch (eval-mode BN) semantics."""
    pooled = jnp.mean(x.astype(jnp.float32), axis=(2, 3))          # (N, C_in)
    h = pooled @ p["w1"].T + p["b1"]
    h = (h - p["mean"]) * lax.rsqrt(p["var"] + BN_EPS) * p["gamma"] + p["beta"]
    h = jnp.maximum(h, 0.0)
    o = h @ p["w2"].T + p["b2"]
    return o.reshape(x.shape[0], x.shape[1], 1, 1).astype(x.dtype)


if __name__ == "__main__":
    key = jax.random.PRNGKey(0)
    kx1, kp1, kx2, kp2, kx3, kp3 = jax.random.split(key, 6)

    # 1) Small demo shape: batch-blocked, single-tile (no-accumulator) path.
    x1 = jax.random.normal(kx1, (2, 8, 16, 16), jnp.float32)
    p1 = make_params(kp1, 8, 4)
    o1 = jax.block_until_ready(channel_attention_forward(x1, p1))
    r1 = reference_forward(x1, p1)
    assert o1.shape == (2, 8, 1, 1)
    assert jnp.allclose(o1, r1, atol=1e-4, rtol=1e-4), float(jnp.max(jnp.abs(o1 - r1)))

    # 2) N=1 ragged multi-tile path: 2-way spatial split, cross-step
    #    accumulator and in-kernel boundary masking (small step budget forces
    #    several spatial tiles).
    x2 = jax.random.normal(kx2, (1, 8, 70, 100), jnp.float32)
    p2 = make_params(kp2, 8, 4)
    o2 = jax.block_until_ready(
        channel_attention_forward(x2, p2, target_step_bytes=64 << 10))
    r2 = reference_forward(x2, p2)
    assert o2.shape == (1, 8, 1, 1)
    assert jnp.allclose(o2, r2, atol=1e-4, rtol=1e-4), float(jnp.max(jnp.abs(o2 - r2)))

    # 3) Tiny odd shape (HW < 128, C not a multiple of 8): full-extent blocks.
    x3 = jax.random.normal(kx3, (3, 5, 5, 5), jnp.float32)
    p3 = make_params(kp3, 5, 3)
    o3 = jax.block_until_ready(channel_attention_forward(x3, p3))
    r3 = reference_forward(x3, p3)
    assert o3.shape == (3, 5, 1, 1)
    assert jnp.allclose(o3, r3, atol=1e-4, rtol=1e-4), float(jnp.max(jnp.abs(o3 - r3)))

    print("KERNEL_OK")
</pallas_src>

<mosaic_0001>
module attributes {stable_mosaic.version = 11 : i64} {
  func.func @_pooled_sum_kernel(%arg0: i32, %arg1: i32, %arg2: i32, %arg3: memref<2x8x256xf32, #tpu.memory_space<vmem>>, %arg4: memref<2x1x8x1xf32, #tpu.memory_space<vmem>>, %arg5: memref<8x128xf32, #tpu.memory_space<vmem>>) attributes {dimension_semantics = [#tpu.dimension_semantics<parallel>, #tpu.dimension_semantics<parallel>, #tpu.dimension_semantics<arbitrary>], iteration_bounds = array<i64: 1, 1, 1>, scalar_prefetch = 0 : i64, scratch_operands = 1 : i64, tpu.core_type = #tpu.core_type<tc>, window_params = [{transform_indices = @transform_0, window_bounds = array<i64: 2, 8, 256>}, {transform_indices = @transform_1, window_bounds = array<i64: 2, 1, 8, 1>}]} {
    %c0 = arith.constant 0 : index
    %c0_0 = arith.constant 0 : index
    %c0_1 = arith.constant 0 : index
    %0 = vector.load %arg3[%c0, %c0_0, %c0_1] : memref<2x8x256xf32, #tpu.memory_space<vmem>>, vector<2x8x256xf32>
    %cst = arith.constant dense<0.000000e+00> : vector<2x8xf32>
    %1 = vector.multi_reduction <add>, %0, %cst [2] : vector<2x8x256xf32> to vector<2x8xf32>
    %2 = vector.shape_cast %1 : vector<2x8xf32> to vector<2x8x1xf32>
    %c0_2 = arith.constant 0 : index
    %c0_3 = arith.constant 0 : index
    %c0_4 = arith.constant 0 : index
    %c0_5 = arith.constant 0 : index
    %3 = vector.load %arg4[%c0_2, %c0_3, %c0_4, %c0_5] : memref<2x1x8x1xf32, #tpu.memory_space<vmem>>, vector<2x1x8x1xf32>
    %4 = vector.shape_cast %3 : vector<2x1x8x1xf32> to vector<2x8x1xf32>
    %5 = vector.shape_cast %2 : vector<2x8x1xf32> to vector<2x1x8x1xf32>
    tpu.vector_store %arg4[%c0_2, %c0_3, %c0_4, %c0_5], %5 {strides = array<i32>} : memref<2x1x8x1xf32, #tpu.memory_space<vmem>>, vector<2x1x8x1xf32>,
    return
  }
  func.func @transform_0(%arg0: i32, %arg1: i32, %arg2: i32) -> (i32, i32, i32) {
    %c1_i32 = arith.constant 1 : i32
    %0 = arith.muli %arg1, %c1_i32 : i32
    %1 = arith.addi %0, %arg2 : i32
    %c0_i32 = arith.constant 0 : i32
    %c0_i32_0 = arith.constant 0 : i32
    return %arg0, %c0_i32, %1 : i32, i32, i32
  }
  func.func @transform_1(%arg0: i32, %arg1: i32, %arg2: i32) -> (i32, i32, i32, i32) {
    %c0_i32 = arith.constant 0 : i32
    %c0_i32_0 = arith.constant 0 : i32
    %c0_i32_1 = arith.constant 0 : i32
    return %arg0, %arg1, %c0_i32, %c0_i32_0 : i32, i32, i32, i32
  }
}

</mosaic_0001>

<llo_original>
// kernel: tpu_custom_call.1
$region0: #{tpu_custom_call.1}
  #allocation0 [shape = 'u32[]', space=smem, size = 0x4, offset = 0x4, fixed_abs, tag = 'smem constant byte address 0x4 - core index']
  #allocation1 [shape = 'u32[144,128]{1,0:T(1,128)}', space=vmem, size = 0x12000, scoped, tag = 'internal scratch']
  #allocation2 [shape = 'f32[8,128]{1,0:T(8,128)}', space=vmem, size = 0x1000, scoped, tag = 'scratch operand']
  %s0 = inlined_call_operand.hbm [shape: f32[2,8,256], index: 0, kind: input, shape index: {}]
  %s1 = inlined_call_operand.vmem [shape: f32[2,1,8,1], index: 1, kind: output, shape index: {}]
  %s2 = sld [smem:[#allocation0]]
  $region18: #{tpu_custom_call.1} parent=0
    _
  %s4 = ssub.s32 1, %s2
  %s5 = scalar_select 0, %s4, %s2
  $region1: #{tpu_custom_call.1} parent=0
    #allocation3 [shape = 'u8[16384]{0}', space=vmem, size = 0x4000, scoped, tag = 'input window, operand 0, single buffered']
    #allocation4 [shape = 's32[1]{0}', space=sflag, size = 0x4, scoped, tag = 'scoped memory for tpu_custom_call.1']
    %6 = vsyncpa [#allocation4], 0
    // Predicated region
    $region2: #{tpu_custom_call.1} parent=1 // pred_check
      _
    $region3: #{tpu_custom_call.1} parent=1 // pred_check_branch
      %8 = sbr.rel (0) target = $region5
    $region4: #{tpu_custom_call.1} parent=1 // pred_region
      %s9 = sadd.s32 0, 0
      %s10 = smul.u32 2, %s9
      %s12 = ssub.s32 512, 512
      %13 = vsyncadd [#allocation4], %s12
      %s14 = smul.addr %s10, 128
      %s15 = scalar_lea.hbm %s0, %s14
      %s16 = sshll.u32 [#allocation3], 4
      %s17 = int_to_ptr.vmem [resolvable:$true] %s16
      %22 = dma.hbm_to_vmem [thread:$0]  %s15, 512, %s17, [#allocation4], 256, 256, 16
    $region5: #{tpu_custom_call.1} parent=1 // pred_fallthru
      _
    // Predicated region
    $region6: #{tpu_custom_call.1} parent=1 // pred_check
      _
    $region7: #{tpu_custom_call.1} parent=1 // pred_check_branch
      %24 = sbr.rel (0) target = $region9
    $region8: #{tpu_custom_call.1} parent=1 // pred_region
      %25 = dma.done [#allocation4], 512
    $region9: #{tpu_custom_call.1} parent=1 // pred_fallthru
      _
    %s26 = sadd.s32 0, 0
    %s27 = smul.u32 2, %s26
    %v28 = vld [vmem:[#allocation3] sm:$0xff]
    %v29 = vld [vmem:[#allocation3 + $0x8] sm:$0xff]
    %v30 = vld [vmem:[#allocation3 + $0x10] sm:$0xff]
    %v31 = vld [vmem:[#allocation3 + $0x18] sm:$0xff]
    %v32 = vadd.f32 %v28, %v29
    %33 = vadd.xlane.f32.xlu0 %v32
    %v34 = vpop.xlane.xlu0 %33
    %v35 = vadd.f32 %v30, %v31
    %36 = vadd.xlane.f32.xlu0 %v35
    %v37 = vpop.xlane.xlu0 %36
    %vm38 = vcmask 7168
    %39 = vst.msk [vmem:[%s1] sm:$0xff] %vm38, %v34
    %40 = vst.msk [vmem:[%s1 + $0x8] sm:$0xff] %vm38, %v37
    // Predicated region
    $region10: #{tpu_custom_call.1} parent=1 // pred_check
      _
    $region11: #{tpu_custom_call.1} parent=1 // pred_check_branch
      %42 = sbr.rel (0) target = $region13
    $region12: #{tpu_custom_call.1} parent=1 // pred_region
      _
    $region13: #{tpu_custom_call.1} parent=1 // pred_fallthru
      _
    // Predicated region
    $region14: #{tpu_custom_call.1} parent=1 // pred_check
      _
    $region15: #{tpu_custom_call.1} parent=1 // pred_check_branch
      %44 = sbr.rel (0) target = $region17
    $region16: #{tpu_custom_call.1} parent=1 // pred_region
      _
    $region17: #{tpu_custom_call.1} parent=1 // pred_fallthru
      _
    %45 = vsyncpa [#allocation4], 1

</llo_original>
